<compile_context>
chip_gen: v7x
topology: tpu7x:2x2x1
jax: 0.10.0
libtpu: 0.0.40
codegen_flags: <defaults>
</compile_context>

<pallas_src>
import math

import jax
import jax.numpy as jnp
from jax import lax
from jax.experimental import pallas as pl
from jax.experimental.pallas import tpu as pltpu

# ---- small GPT-2-like config --------------------------------------------------
BATCH = 2
SEQ = 8
EMBED = 32
NUM_HEADS = 4
HEAD_DIM = EMBED // NUM_HEADS
SCALE_ATTN_WEIGHTS = True            # config.scale_attn_weights
SCALE_BY_INV_LAYER_IDX = False       # config.scale_attn_by_inverse_layer_idx
LAYER_IDX = 0


def _gpt2_attn_head_kernel(x_ref, wqkv_ref, bqkv_ref, wproj_ref, bproj_ref,
                           o_ref, acc_ref):
    """One grid step = one (batch element, head) pair.

    x_ref     : [1, S, E]    hidden_states for this batch element (MXU dtype)
    wqkv_ref  : [1, E, 3*Dh] this head's c_attn columns [q_h | k_h | v_h] (MXU dtype)
    bqkv_ref  : [1, 1, 3*Dh] this head's c_attn bias (f32)
    wproj_ref : [1, Dh, E]   this head's c_proj rows (MXU dtype)
    bproj_ref : [1, E]       c_proj bias (f32)
    o_ref     : [1, S, E]    attention output for this batch element
    acc_ref   : [S, E] f32   c_proj accumulator, reduced over the head grid axis
    """
    h = pl.program_id(1)
    S = x_ref.shape[1]
    Dh = wproj_ref.shape[1]
    mdt = x_ref.dtype                     # MXU operand dtype (bf16 by default)

    @pl.when(h == 0)
    def _init():
        acc_ref[...] = jnp.zeros_like(acc_ref)

    x = x_ref[0]                          # [S, E]
    w_h = wqkv_ref[0]                     # [E, 3*Dh]
    b_h = bqkv_ref[0]                     # [1, 3*Dh] f32

    # ---- per-head c_attn slice: contracts over E, only this head's 3*Dh columns
    qkv = jnp.dot(x, w_h, preferred_element_type=jnp.float32) + b_h   # [S, 3*Dh] f32

    q = qkv[:, 0 * Dh:1 * Dh]
    k = qkv[:, 1 * Dh:2 * Dh]
    v = qkv[:, 2 * Dh:3 * Dh]

    # ---- scores: contract over Dh only; NT dot (no k transpose materialized) --
    s = lax.dot_general(q.astype(mdt), k.astype(mdt),
                        (((1,), (1,)), ((), ())),
                        preferred_element_type=jnp.float32)           # [S, S] f32

    # scale applied AFTER the matmul (matches the reference ordering; safe with
    # bf16 matmul operands since the scores are already f32 here).
    scale = 1.0
    if SCALE_ATTN_WEIGHTS:
        scale = scale / math.sqrt(float(Dh))
    if SCALE_BY_INV_LAYER_IDX:
        scale = scale / float(LAYER_IDX + 1)
    s = s * scale

    # causal mask; scores stay f32 so finfo(f32).min matches the reference fill.
    qi = lax.broadcasted_iota(jnp.int32, (S, S), 0)
    kj = lax.broadcasted_iota(jnp.int32, (S, S), 1)
    s = jnp.where(qi >= kj, s, jnp.finfo(s.dtype).min)

    p = jax.nn.softmax(s, axis=-1)                                    # f32 (v5e-safe)

    # ---- attn @ v for this head -----------------------------------------------
    o_h = jnp.dot(p.astype(mdt), v.astype(mdt),
                  preferred_element_type=jnp.float32)                 # [S, Dh] f32

    # ---- per-head c_proj partial, accumulated over the head grid axis ---------
    acc_ref[...] += jnp.dot(o_h.astype(mdt), wproj_ref[0],
                            preferred_element_type=jnp.float32)       # [S, E]

    @pl.when(h == pl.num_programs(1) - 1)
    def _finish():
        o_ref[0] = (acc_ref[...] + bproj_ref[...]).astype(o_ref.dtype)


def gpt2_attention(x, w_qkv, b_qkv, w_proj, b_proj, *, num_heads=NUM_HEADS,
                   mxu_dtype=jnp.bfloat16):
    """GPT2Attention.forward (eval mode, no cache/cross-attn/extra masks)."""
    B, S, E = x.shape
    Dh = E // num_heads
    assert Dh * num_heads == E

    # ---- parameter re-layout into per-head slabs (do once at load time in a
    # real model; pure layout plumbing, not per-call compute at scale). ---------
    wq, wk, wv = jnp.split(w_qkv, 3, axis=1)                          # [E, E] each

    def _heads_out(w):                                                # [E, E] -> [H, E, Dh]
        return w.reshape(E, num_heads, Dh).transpose(1, 0, 2)

    w_qkv_h = jnp.concatenate(
        [_heads_out(wq), _heads_out(wk), _heads_out(wv)], axis=-1
    ).astype(mxu_dtype)                                               # [H, E, 3*Dh]

    bq, bk, bv = jnp.split(b_qkv, 3)
    b_qkv_h = jnp.concatenate(
        [bq.reshape(num_heads, 1, Dh),
         bk.reshape(num_heads, 1, Dh),
         bv.reshape(num_heads, 1, Dh)], axis=-1
    ).astype(jnp.float32)                                             # [H, 1, 3*Dh]

    w_proj_h = w_proj.reshape(num_heads, Dh, E).astype(mxu_dtype)     # [H, Dh, E]
    b_proj2 = b_proj.reshape(1, E).astype(jnp.float32)                # [1, E]
    x_mxu = x.astype(mxu_dtype)

    out = pl.pallas_call(
        _gpt2_attn_head_kernel,
        out_shape=jax.ShapeDtypeStruct((B, S, E), x.dtype),
        grid_spec=pltpu.PrefetchScalarGridSpec(
            num_scalar_prefetch=0,
            grid=(B, num_heads),                                      # heads = reduction axis, last
            in_specs=[
                pl.BlockSpec((1, S, E), lambda b, h: (b, 0, 0)),      # hidden_states (resident over h)
                pl.BlockSpec((1, E, 3 * Dh), lambda b, h: (h, 0, 0)), # c_attn W, per-head slab
                pl.BlockSpec((1, 1, 3 * Dh), lambda b, h: (h, 0, 0)), # c_attn b, per-head slab
                pl.BlockSpec((1, Dh, E), lambda b, h: (h, 0, 0)),     # c_proj W rows, per-head slab
                pl.BlockSpec((1, E), lambda b, h: (0, 0)),            # c_proj bias
            ],
            out_specs=pl.BlockSpec((1, S, E), lambda b, h: (b, 0, 0)),
            scratch_shapes=[pltpu.VMEM((S, E), jnp.float32)],         # c_proj accumulator
        ),
        compiler_params=pltpu.CompilerParams(
            dimension_semantics=("parallel", "arbitrary"),            # batch shards across v7x's 2 TCs
            vmem_limit_bytes=32 * 1024 * 1024,                        # v7x-safe scoped-VMEM budget
        ),
    )(x_mxu, w_qkv_h, b_qkv_h, w_proj_h, b_proj2)
    return out


def _reference(x, w_qkv, b_qkv, w_proj, b_proj):
    """Pure-JAX f32 reference mirroring the PyTorch forward (eval mode)."""
    B, S, E = x.shape
    qkv = x @ w_qkv + b_qkv
    q, k, v = jnp.split(qkv, 3, axis=-1)

    def split_heads(t):
        return t.reshape(B, S, NUM_HEADS, HEAD_DIM).transpose(0, 2, 1, 3)

    q, k, v = split_heads(q), split_heads(k), split_heads(v)
    s = jnp.einsum("bhqd,bhkd->bhqk", q, k)
    if SCALE_ATTN_WEIGHTS:
        s = s / math.sqrt(float(HEAD_DIM))
    if SCALE_BY_INV_LAYER_IDX:
        s = s / float(LAYER_IDX + 1)
    causal = jnp.tril(jnp.ones((S, S), dtype=bool))
    s = jnp.where(causal[None, None], s, jnp.finfo(s.dtype).min)
    p = jax.nn.softmax(s, axis=-1)
    o = jnp.einsum("bhqk,bhkd->bhqd", p, v)
    o = o.transpose(0, 2, 1, 3).reshape(B, S, E)
    return o @ w_proj + b_proj


if __name__ == "__main__":
    key = jax.random.PRNGKey(0)
    kx, k1, k2, k3, k4 = jax.random.split(key, 5)

    x = jax.random.normal(kx, (BATCH, SEQ, EMBED), dtype=jnp.float32)
    # Conv1D params (deterministic init): weight [in, out], bias [out]
    w_qkv = jax.random.normal(k1, (EMBED, 3 * EMBED), dtype=jnp.float32) * 0.02
    b_qkv = jax.random.normal(k2, (3 * EMBED,), dtype=jnp.float32) * 0.02
    w_proj = jax.random.normal(k3, (EMBED, EMBED), dtype=jnp.float32) * 0.02
    b_proj = jax.random.normal(k4, (EMBED,), dtype=jnp.float32) * 0.02

    out = gpt2_attention(x, w_qkv, b_qkv, w_proj, b_proj)
    out = jax.block_until_ready(out)

    ref = _reference(x, w_qkv, b_qkv, w_proj, b_proj)
    # Tolerance covers bf16 MXU operands (f32 accumulation / f32 softmax); expected
    # absolute deviation at these magnitudes is ~1e-4.
    if not jnp.allclose(out, ref, atol=2e-3, rtol=2e-2):
        raise AssertionError("Pallas output does not match reference")

    print("KERNEL_OK")
</pallas_src>

<mosaic_0001>
module attributes {stable_mosaic.version = 11 : i64} {
  func.func @_gpt2_attn_head_kernel(%arg0: i32, %arg1: i32, %arg2: memref<1x8x32xbf16, #tpu.memory_space<vmem>>, %arg3: memref<1x32x24xbf16, #tpu.memory_space<vmem>>, %arg4: memref<1x1x24xf32, #tpu.memory_space<vmem>>, %arg5: memref<1x8x32xbf16, #tpu.memory_space<vmem>>, %arg6: memref<1x32xf32, #tpu.memory_space<vmem>>, %arg7: memref<1x8x32xf32, #tpu.memory_space<vmem>>, %arg8: memref<8x32xf32, #tpu.memory_space<vmem>>) attributes {dimension_semantics = [#tpu.dimension_semantics<parallel>, #tpu.dimension_semantics<arbitrary>], iteration_bounds = array<i64: 2, 4>, scalar_prefetch = 0 : i64, scratch_operands = 1 : i64, tpu.core_type = #tpu.core_type<tc>, window_params = [{transform_indices = @transform_0, window_bounds = array<i64: 1, 8, 32>}, {transform_indices = @transform_1, window_bounds = array<i64: 1, 32, 24>}, {transform_indices = @transform_2, window_bounds = array<i64: 1, 1, 24>}, {transform_indices = @transform_3, window_bounds = array<i64: 1, 8, 32>}, {pipeline_mode = #tpu.pipeline_mode<synchronous>, transform_indices = @transform_4, window_bounds = array<i64: 1, 32>}, {transform_indices = @transform_5, window_bounds = array<i64: 1, 8, 32>}]} {
    %c0_i32 = arith.constant 0 : i32
    %0 = arith.cmpi eq, %arg1, %c0_i32 : i32
    %1 = arith.extui %0 : i1 to i32
    %c0_i32_0 = arith.constant 0 : i32
    %2 = arith.cmpi ne, %1, %c0_i32_0 : i32
    scf.if %2 {
      %cst_25 = arith.constant 0.000000e+00 : f32
      %49 = vector.broadcast %cst_25 : f32 to vector<8x32xf32>
      %c0_26 = arith.constant 0 : index
      %c0_27 = arith.constant 0 : index
      %50 = vector.load %arg8[%c0_26, %c0_27] : memref<8x32xf32, #tpu.memory_space<vmem>>, vector<8x32xf32>
      tpu.vector_store %arg8[%c0_26, %c0_27], %49 {strides = array<i32>} : memref<8x32xf32, #tpu.memory_space<vmem>>, vector<8x32xf32>,
    } else {
    }
    %c0 = arith.constant 0 : index
    %c0_1 = arith.constant 0 : index
    %c0_2 = arith.constant 0 : index
    %3 = vector.load %arg2[%c0, %c0_1, %c0_2] : memref<1x8x32xbf16, #tpu.memory_space<vmem>>, vector<1x8x32xbf16>
    %4 = vector.shape_cast %3 : vector<1x8x32xbf16> to vector<8x32xbf16>
    %c0_3 = arith.constant 0 : index
    %c0_4 = arith.constant 0 : index
    %c0_5 = arith.constant 0 : index
    %5 = vector.load %arg3[%c0_3, %c0_4, %c0_5] : memref<1x32x24xbf16, #tpu.memory_space<vmem>>, vector<1x32x24xbf16>
    %6 = vector.shape_cast %5 : vector<1x32x24xbf16> to vector<32x24xbf16>
    %c0_6 = arith.constant 0 : index
    %c0_7 = arith.constant 0 : index
    %c0_8 = arith.constant 0 : index
    %7 = vector.load %arg4[%c0_6, %c0_7, %c0_8] : memref<1x1x24xf32, #tpu.memory_space<vmem>>, vector<1x1x24xf32>
    %8 = vector.shape_cast %7 : vector<1x1x24xf32> to vector<1x24xf32>
    %cst = arith.constant dense<0.000000e+00> : vector<8x24xf32>
    %9 = tpu.matmul %4, %6, %cst {dimension_numbers = #tpu.dot_dimension_numbers<[1], [0], [0], [1], [0, 0, 1, 1], [], []>} : vector<8x32xbf16>, vector<32x24xbf16>, vector<8x24xf32> -> vector<8x24xf32>
    %10 = vector.broadcast %8 : vector<1x24xf32> to vector<8x24xf32>
    %11 = arith.addf %9, %10 : vector<8x24xf32>
    %12 = vector.extract_strided_slice %11 {offsets = [0, 0], sizes = [8, 8], strides = [1, 1]} : vector<8x24xf32> to vector<8x8xf32>
    %13 = vector.extract_strided_slice %11 {offsets = [0, 8], sizes = [8, 8], strides = [1, 1]} : vector<8x24xf32> to vector<8x8xf32>
    %14 = vector.extract_strided_slice %11 {offsets = [0, 16], sizes = [8, 8], strides = [1, 1]} : vector<8x24xf32> to vector<8x8xf32>
    %15 = arith.truncf %12 : vector<8x8xf32> to vector<8x8xbf16>
    %16 = arith.truncf %13 : vector<8x8xf32> to vector<8x8xbf16>
    %cst_9 = arith.constant dense<0.000000e+00> : vector<8x8xf32>
    %17 = tpu.matmul %15, %16, %cst_9 {dimension_numbers = #tpu.dot_dimension_numbers<[1], [1], [0], [0], [0, 0, 1, 0], [], []>} : vector<8x8xbf16>, vector<8x8xbf16>, vector<8x8xf32> -> vector<8x8xf32>
    %cst_10 = arith.constant 0.353553385 : f32
    %18 = vector.broadcast %cst_10 : f32 to vector<8x8xf32>
    %19 = arith.mulf %17, %18 : vector<8x8xf32>
    %20 = tpu.iota {dimensions = array<i32: 0>} : vector<8x8xi32>
    %21 = tpu.iota {dimensions = array<i32: 1>} : vector<8x8xi32>
    %22 = arith.cmpi sge, %20, %21 : vector<8x8xi32>
    %cst_11 = arith.constant -3.40282347E+38 : f32
    %23 = vector.broadcast %cst_11 : f32 to vector<8x8xf32>
    %24 = arith.select %22, %19, %23 : vector<8x8xi1>, vector<8x8xf32>
    %cst_12 = arith.constant dense<0xFF800000> : vector<8xf32>
    %25 = vector.multi_reduction <maximumf>, %24, %cst_12 [1] : vector<8x8xf32> to vector<8xf32>
    %cst_13 = arith.constant 0xFF800000 : f32
    %26 = vector.broadcast %cst_13 : f32 to vector<8xf32>
    %27 = arith.maximumf %26, %25 : vector<8xf32>
    %28 = vector.shape_cast %27 : vector<8xf32> to vector<8x1xf32>
    %29 = vector.broadcast %28 : vector<8x1xf32> to vector<8x8xf32>
    %30 = arith.subf %24, %29 : vector<8x8xf32>
    %31 = math.exp %30 : vector<8x8xf32>
    %cst_14 = arith.constant dense<0.000000e+00> : vector<8xf32>
    %32 = vector.multi_reduction <add>, %31, %cst_14 [1] : vector<8x8xf32> to vector<8xf32>
    %33 = vector.shape_cast %32 : vector<8xf32> to vector<8x1xf32>
    %34 = vector.broadcast %33 : vector<8x1xf32> to vector<8x8xf32>
    %35 = arith.divf %31, %34 : vector<8x8xf32>
    %36 = arith.truncf %35 : vector<8x8xf32> to vector<8x8xbf16>
    %37 = arith.truncf %14 : vector<8x8xf32> to vector<8x8xbf16>
    %cst_15 = arith.constant dense<0.000000e+00> : vector<8x8xf32>
    %38 = tpu.matmul %36, %37, %cst_15 {dimension_numbers = #tpu.dot_dimension_numbers<[1], [0], [0], [1], [0, 0, 1, 1], [], []>} : vector<8x8xbf16>, vector<8x8xbf16>, vector<8x8xf32> -> vector<8x8xf32>
    %c0_16 = arith.constant 0 : index
    %c0_17 = arith.constant 0 : index
    %39 = vector.load %arg8[%c0_16, %c0_17] : memref<8x32xf32, #tpu.memory_space<vmem>>, vector<8x32xf32>
    %40 = arith.truncf %38 : vector<8x8xf32> to vector<8x8xbf16>
    %c0_18 = arith.constant 0 : index
    %c0_19 = arith.constant 0 : index
    %c0_20 = arith.constant 0 : index
    %41 = vector.load %arg5[%c0_18, %c0_19, %c0_20] : memref<1x8x32xbf16, #tpu.memory_space<vmem>>, vector<1x8x32xbf16>
    %42 = vector.shape_cast %41 : vector<1x8x32xbf16> to vector<8x32xbf16>
    %cst_21 = arith.constant dense<0.000000e+00> : vector<8x32xf32>
    %43 = tpu.matmul %40, %42, %cst_21 {dimension_numbers = #tpu.dot_dimension_numbers<[1], [0], [0], [1], [0, 0, 1, 1], [], []>} : vector<8x8xbf16>, vector<8x32xbf16>, vector<8x32xf32> -> vector<8x32xf32>
    %44 = arith.addf %39, %43 : vector<8x32xf32>
    %c0_22 = arith.constant 0 : index
    %c0_23 = arith.constant 0 : index
    %45 = vector.load %arg8[%c0_22, %c0_23] : memref<8x32xf32, #tpu.memory_space<vmem>>, vector<8x32xf32>
    tpu.vector_store %arg8[%c0_22, %c0_23], %44 {strides = array<i32>} : memref<8x32xf32, #tpu.memory_space<vmem>>, vector<8x32xf32>,
    %c3_i32 = arith.constant 3 : i32
    %46 = arith.cmpi eq, %arg1, %c3_i32 : i32
    %47 = arith.extui %46 : i1 to i32
    %c0_i32_24 = arith.constant 0 : i32
    %48 = arith.cmpi ne, %47, %c0_i32_24 : i32
    scf.if %48 {
      %c0_25 = arith.constant 0 : index
      %c0_26 = arith.constant 0 : index
      %49 = vector.load %arg8[%c0_25, %c0_26] : memref<8x32xf32, #tpu.memory_space<vmem>>, vector<8x32xf32>
      %c0_27 = arith.constant 0 : index
      %c0_28 = arith.constant 0 : index
      %50 = vector.load %arg6[%c0_27, %c0_28] : memref<1x32xf32, #tpu.memory_space<vmem>>, vector<1x32xf32>
      %51 = vector.broadcast %50 : vector<1x32xf32> to vector<8x32xf32>
      %52 = arith.addf %49, %51 : vector<8x32xf32>
      %c0_29 = arith.constant 0 : index
      %c0_30 = arith.constant 0 : index
      %c0_31 = arith.constant 0 : index
      %53 = vector.load %arg7[%c0_29, %c0_30, %c0_31] : memref<1x8x32xf32, #tpu.memory_space<vmem>>, vector<1x8x32xf32>
      %54 = vector.shape_cast %53 : vector<1x8x32xf32> to vector<8x32xf32>
      %55 = vector.shape_cast %52 : vector<8x32xf32> to vector<1x8x32xf32>
      tpu.vector_store %arg7[%c0_29, %c0_30, %c0_31], %55 {strides = array<i32>} : memref<1x8x32xf32, #tpu.memory_space<vmem>>, vector<1x8x32xf32>,
    } else {
    }
    return
  }
  func.func @transform_0(%arg0: i32, %arg1: i32) -> (i32, i32, i32) {
    %c0_i32 = arith.constant 0 : i32
    %c0_i32_0 = arith.constant 0 : i32
    %c0_i32_1 = arith.constant 0 : i32
    return %arg0, %c0_i32, %c0_i32_0 : i32, i32, i32
  }
  func.func @transform_1(%arg0: i32, %arg1: i32) -> (i32, i32, i32) {
    %c0_i32 = arith.constant 0 : i32
    %c0_i32_0 = arith.constant 0 : i32
    %c0_i32_1 = arith.constant 0 : i32
    return %arg1, %c0_i32, %c0_i32_0 : i32, i32, i32
  }
  func.func @transform_2(%arg0: i32, %arg1: i32) -> (i32, i32, i32) {
    %c0_i32 = arith.constant 0 : i32
    %c0_i32_0 = arith.constant 0 : i32
    %c0_i32_1 = arith.constant 0 : i32
    return %arg1, %c0_i32, %c0_i32_0 : i32, i32, i32
  }
  func.func @transform_3(%arg0: i32, %arg1: i32) -> (i32, i32, i32) {
    %c0_i32 = arith.constant 0 : i32
    %c0_i32_0 = arith.constant 0 : i32
    %c0_i32_1 = arith.constant 0 : i32
    return %arg1, %c0_i32, %c0_i32_0 : i32, i32, i32
  }
  func.func @transform_4(%arg0: i32, %arg1: i32) -> (i32, i32) {
    %c0_i32 = arith.constant 0 : i32
    %c0_i32_0 = arith.constant 0 : i32
    %c0_i32_1 = arith.constant 0 : i32
    return %c0_i32, %c0_i32_0 : i32, i32
  }
  func.func @transform_5(%arg0: i32, %arg1: i32) -> (i32, i32, i32) {
    %c0_i32 = arith.constant 0 : i32
    %c0_i32_0 = arith.constant 0 : i32
    %c0_i32_1 = arith.constant 0 : i32
    return %arg0, %c0_i32, %c0_i32_0 : i32, i32, i32
  }
}

</mosaic_0001>

<llo_original>
// kernel: tpu_custom_call.1
$region0: #{tpu_custom_call.1}
  #allocation0 [shape = 'u32[]', space=smem, size = 0x4, offset = 0x4, fixed_abs, tag = 'smem constant byte address 0x4 - core index']
  #allocation1 [shape = 'u32[144,128]{1,0:T(1,128)}', space=vmem, size = 0x12000, scoped, tag = 'internal scratch']
  #allocation2 [shape = 'f32[8,32]{1,0:T(8,128)}', space=vmem, size = 0x1000, scoped, tag = 'scratch operand']
  %s0 = inlined_call_operand.vmem [shape: bf16[2,8,32], index: 0, kind: input, shape index: {}]
  %s1 = inlined_call_operand.vmem [shape: bf16[4,32,24], index: 1, kind: input, shape index: {}]
  %s2 = inlined_call_operand.vmem [shape: f32[4,1,24], index: 2, kind: input, shape index: {}]
  %s3 = inlined_call_operand.vmem [shape: bf16[4,8,32], index: 3, kind: input, shape index: {}]
  %s4 = inlined_call_operand.vmem [shape: f32[1,32], index: 4, kind: input, shape index: {}]
  %s5 = inlined_call_operand.hbm [shape: f32[2,8,32], index: 5, kind: output, shape index: {}]
  %s6 = sld [smem:[#allocation0]]
  $region61: #{tpu_custom_call.1} parent=0
    _
  %s8 = ssub.s32 1, %s6
  %s9 = scalar_select 0, %s8, %s6
  $region1: #{tpu_custom_call.1} parent=0
    #allocation3 [shape = 'u8[8192]{0}', space=vmem, size = 0x2000, scoped, tag = 'output window, operand 0']
    #allocation4 [shape = 's32[2]{0}', space=sflag, size = 0x8, scoped, tag = 'scoped memory for tpu_custom_call.1']
    %10 = vsyncpa [#allocation4], 0
    %s11 = scalar_lea.sflag [#allocation4], 1
    %12 = vsyncpa %s11, 0
    loop: start=0, step=1, limit=10
    $region2: #{tpu_custom_call.1} parent=1 // loop_pre_header
      _
    $region3: #{tpu_custom_call.1} parent=1 // loop_header
      %s14 = sphi 0, %s18
      %p15 = scmp.ge.s32.totalorder %s14, 10
      %s21 = sphi 0, %s33
      %s22 = sphi 0, %s29
      %s23 = sphi 0, %s21
      %s24 = sphi 0, %s22
      %s25 = sphi 0, %s23
      %s26 = sphi 0, %s24
      %s36 = sphi 0, %s38
      %s39 = sphi 0, %s36
      %s40 = sphi 0, %s39
      %s56 = sphi 0, %s40
      %s62 = sphi 0, %s64
      %s65 = sphi 0, %s62
      %s66 = sphi 0, %s65
      %s82 = sphi 0, %s66
      %s88 = sphi 0, %s90
      %s91 = sphi 0, %s88
      %s92 = sphi 0, %s91
      %s108 = sphi 0, %s92
      %s114 = sphi 0, %s116
      %s117 = sphi 0, %s114
      %s118 = sphi 0, %s117
      %s134 = sphi 0, %s118
      %s138 = sphi 0, %s138
      %s140 = sphi 0, %s138
      %s141 = sphi 0, %s140
      %s155 = sphi 0, %s141
      %s161 = sphi 0, %s163
      %s164 = sphi 0, %s161
      %s165 = sphi 0, %s164
      %s181 = sphi 0, %s165
    $region4: #{tpu_custom_call.1} parent=1 // loop_header_branch
      %17 = sbr.rel (%p15) target = $region8
    $region5: #{tpu_custom_call.1} parent=1 // loop_body
      %s19 = ssub.s32 %s14, 1
      %s20 = ssub.s32 %s14, 2
      %s27 = sadd.s32 1, %s22
      %p28 = scmp.ge.s32.totalorder %s27, 4
      %s29 = scalar_select %p28, 0, %s27
      %s30 = sadd.s32 1, %s21
      %s31 = scalar_select %p28, %s30, %s21
      %p32 = scmp.ge.s32.totalorder %s31, 2
      %s33 = scalar_select %p32, 0, %s31
      %s34 = ssub.s32 %s21, %s33
      %p35 = scmp.eq.s32.totalorder %s34, 0
      %s37 = sadd.s32 %s36, 1
      %s38 = scalar_select %p35, %s36, %s37
      %p41 = pneg %p35
      %p42 = scmp.eq.s32.totalorder %s14, 7
      %p43 = por %p41, %p42
      %p44 = scmp.ne.s32.totalorder %s36, %s39
      %p45 = scmp.eq.s32.totalorder %s14, 0
      %p46 = por %p44, %p45
      %p47 = scmp.ne.s32.totalorder %s36, %s39
      %p48 = scmp.eq.s32.totalorder %s19, 7
      %p49 = por %p47, %p48
      %p50 = scmp.ne.s32.totalorder %s39, %s40
      %p51 = scmp.eq.s32.totalorder %s19, 0
      %p52 = por %p50, %p51
      %p53 = scmp.ne.s32.totalorder %s39, %s40
      %p54 = scmp.eq.s32.totalorder %s20, 7
      %p55 = por %p53, %p54
      %p57 = scmp.ne.s32.totalorder %s40, %s56
      %p58 = scmp.eq.s32.totalorder %s20, 0
      %p59 = por %p57, %p58
      %s60 = ssub.s32 %s22, %s29
      %p61 = scmp.eq.s32.totalorder %s60, 0
      %s63 = sadd.s32 %s62, 1
      %s64 = scalar_select %p61, %s62, %s63
      %p67 = pneg %p61
      %p68 = scmp.eq.s32.totalorder %s14, 7
      %p69 = por %p67, %p68
      %p70 = scmp.ne.s32.totalorder %s62, %s65
      %p71 = scmp.eq.s32.totalorder %s14, 0
      %p72 = por %p70, %p71
      %p73 = scmp.ne.s32.totalorder %s62, %s65
      %p74 = scmp.eq.s32.totalorder %s19, 7
      %p75 = por %p73, %p74
      %p76 = scmp.ne.s32.totalorder %s65, %s66
      %p77 = scmp.eq.s32.totalorder %s19, 0
      %p78 = por %p76, %p77
      %p79 = scmp.ne.s32.totalorder %s65, %s66
      %p80 = scmp.eq.s32.totalorder %s20, 7
      %p81 = por %p79, %p80
      %p83 = scmp.ne.s32.totalorder %s66, %s82
      %p84 = scmp.eq.s32.totalorder %s20, 0
      %p85 = por %p83, %p84
      %s86 = ssub.s32 %s22, %s29
      %p87 = scmp.eq.s32.totalorder %s86, 0
      %s89 = sadd.s32 %s88, 1
      %s90 = scalar_select %p87, %s88, %s89
      %p93 = pneg %p87
      %p94 = scmp.eq.s32.totalorder %s14, 7
      %p95 = por %p93, %p94
      %p96 = scmp.ne.s32.totalorder %s88, %s91
      %p97 = scmp.eq.s32.totalorder %s14, 0
      %p98 = por %p96, %p97
      %p99 = scmp.ne.s32.totalorder %s88, %s91
      %p100 = scmp.eq.s32.totalorder %s19, 7
      %p101 = por %p99, %p100
      %p102 = scmp.ne.s32.totalorder %s91, %s92
      %p103 = scmp.eq.s32.totalorder %s19, 0
      %p104 = por %p102, %p103
      %p105 = scmp.ne.s32.totalorder %s91, %s92
      %p106 = scmp.eq.s32.totalorder %s20, 7
      %p107 = por %p105, %p106
      %p109 = scmp.ne.s32.totalorder %s92, %s108
      %p110 = scmp.eq.s32.totalorder %s20, 0
      %p111 = por %p109, %p110
      %s112 = ssub.s32 %s22, %s29
      %p113 = scmp.eq.s32.totalorder %s112, 0
      %s115 = sadd.s32 %s114, 1
      %s116 = scalar_select %p113, %s114, %s115
      %p119 = pneg %p113
      %p120 = scmp.eq.s32.totalorder %s14, 7
      %p121 = por %p119, %p120
      %p122 = scmp.ne.s32.totalorder %s114, %s117
      %p123 = scmp.eq.s32.totalorder %s14, 0
      %p124 = por %p122, %p123
      %p125 = scmp.ne.s32.totalorder %s114, %s117
      %p126 = scmp.eq.s32.totalorder %s19, 7
      %p127 = por %p125, %p126
      %p128 = scmp.ne.s32.totalorder %s117, %s118
      %p129 = scmp.eq.s32.totalorder %s19, 0
      %p130 = por %p128, %p129
      %p131 = scmp.ne.s32.totalorder %s117, %s118
      %p132 = scmp.eq.s32.totalorder %s20, 7
      %p133 = por %p131, %p132
      %p135 = scmp.ne.s32.totalorder %s118, %s134
      %p136 = scmp.eq.s32.totalorder %s20, 0
      %p137 = por %p135, %p136
      %s139 = sadd.s32 %s138, 1
      %p142 = scmp.eq.s32.totalorder %s14, 7
      %p143 = scmp.ne.s32.totalorder %s138, %s140
      %p144 = scmp.eq.s32.totalorder %s14, 0
      %p145 = por %p143, %p144
      %p146 = scmp.ne.s32.totalorder %s138, %s140
      %p147 = scmp.eq.s32.totalorder %s19, 7
      %p148 = por %p146, %p147
      %p149 = scmp.ne.s32.totalorder %s140, %s141
      %p150 = scmp.eq.s32.totalorder %s19, 0
      %p151 = por %p149, %p150
      %p152 = scmp.ne.s32.totalorder %s140, %s141
      %p153 = scmp.eq.s32.totalorder %s20, 7
      %p154 = por %p152, %p153
      %p156 = scmp.ne.s32.totalorder %s141, %s155
      %p157 = scmp.eq.s32.totalorder %s20, 0
      %p158 = por %p156, %p157
      %s159 = ssub.s32 %s21, %s33
      %p160 = scmp.eq.s32.totalorder %s159, 0
      %s162 = sadd.s32 %s161, 1
      %s163 = scalar_select %p160, %s161, %s162
      %p166 = pneg %p160
      %p167 = scmp.eq.s32.totalorder %s14, 7
      %p168 = por %p166, %p167
      %p169 = scmp.ne.s32.totalorder %s161, %s164
      %p170 = scmp.eq.s32.totalorder %s14, 0
      %p171 = por %p169, %p170
      %p172 = scmp.ne.s32.totalorder %s161, %s164
      %p173 = scmp.eq.s32.totalorder %s19, 7
      %p174 = por %p172, %p173
      %p175 = scmp.ne.s32.totalorder %s164, %s165
      %p176 = scmp.eq.s32.totalorder %s19, 0
      %p177 = por %p175, %p176
      %p178 = scmp.ne.s32.totalorder %s164, %s165
      %p179 = scmp.eq.s32.totalorder %s20, 7
      %p180 = por %p178, %p179
      %p182 = scmp.ne.s32.totalorder %s165, %s181
      %p183 = scmp.eq.s32.totalorder %s20, 0
      %p184 = por %p182, %p183
      %p185 = scmp.le.s32.totalorder 1, %s14
      %p186 = scmp.lt.s32.totalorder %s14, 9
      %p187 = pnand %p185, %p186
      %p188 = pneg %p187
      // Predicated region
      $region9: #{tpu_custom_call.1} parent=5 // pred_check
        _
      $region10: #{tpu_custom_call.1} parent=5 // pred_check_branch
        %190 = sbr.rel (%p187) target = $region12
      $region11: #{tpu_custom_call.1} parent=5 // pred_region
        %s191 = ssub.s32 %s14, 1
        // Predicated region
        $region13: #{tpu_custom_call.1} parent=11 // pred_check
          %p192 = pneg %p151
        $region14: #{tpu_custom_call.1} parent=11 // pred_check_branch
          %194 = sbr.rel (%p192) target = $region16
        $region15: #{tpu_custom_call.1} parent=11 // pred_region
          _
        $region16: #{tpu_custom_call.1} parent=11 // pred_fallthru
          _
      $region12: #{tpu_custom_call.1} parent=5 // pred_fallthru
        _
      %p195 = scmp.lt.s32.totalorder %s14, 8
      // Predicated region
      $region17: #{tpu_custom_call.1} parent=5 // pred_check
        %p196 = pneg %p195
      $region18: #{tpu_custom_call.1} parent=5 // pred_check_branch
        %198 = sbr.rel (%p196) target = $region20
      $region19: #{tpu_custom_call.1} parent=5 // pred_region
        // Predicated region
        $region21: #{tpu_custom_call.1} parent=19 // pred_check
          %p199 = pneg %p46
        $region22: #{tpu_custom_call.1} parent=19 // pred_check_branch
          %201 = sbr.rel (%p199) target = $region24
        $region23: #{tpu_custom_call.1} parent=19 // pred_region
          %p202 = scmp.lt.s32.totalorder %s21, 1
          %s203 = scalar_select %p202, %s21, 1
          %s204 = smul.addr %s203, 4
          %s205 = scalar_lea.vmem %s0, %s204
        $region24: #{tpu_custom_call.1} parent=19 // pred_fallthru
          _
        // Predicated region
        $region25: #{tpu_custom_call.1} parent=19 // pred_check
          %p206 = pneg %p72
        $region26: #{tpu_custom_call.1} parent=19 // pred_check_branch
          %208 = sbr.rel (%p206) target = $region28
        $region27: #{tpu_custom_call.1} parent=19 // pred_region
          %p209 = scmp.lt.s32.totalorder %s22, 3
          %s210 = scalar_select %p209, %s22, 3
          %s211 = smul.addr %s210, 4
          %s212 = smul.addr %s211, 4
          %s213 = scalar_lea.vmem %s1, %s212
        $region28: #{tpu_custom_call.1} parent=19 // pred_fallthru
          _
        // Predicated region
        $region29: #{tpu_custom_call.1} parent=19 // pred_check
          %p214 = pneg %p98
        $region30: #{tpu_custom_call.1} parent=19 // pred_check_branch
          %216 = sbr.rel (%p214) target = $region32
        $region31: #{tpu_custom_call.1} parent=19 // pred_region
          %p217 = scmp.lt.s32.totalorder %s22, 3
          %s218 = scalar_select %p217, %s22, 3
          %s219 = scalar_lea.vmem %s2, %s218
        $region32: #{tpu_custom_call.1} parent=19 // pred_fallthru
          _
        // Predicated region
        $region33: #{tpu_custom_call.1} parent=19 // pred_check
          %p220 = pneg %p124
        $region34: #{tpu_custom_call.1} parent=19 // pred_check_branch
          %222 = sbr.rel (%p220) target = $region36
        $region35: #{tpu_custom_call.1} parent=19 // pred_region
          %p223 = scmp.lt.s32.totalorder %s22, 3
          %s224 = scalar_select %p223, %s22, 3
          %s225 = smul.addr %s224, 4
          %s226 = scalar_lea.vmem %s3, %s225
        $region36: #{tpu_custom_call.1} parent=19 // pred_fallthru
          _
      $region20: #{tpu_custom_call.1} parent=5 // pred_fallthru
        _
      %p227 = scmp.le.s32.totalorder 1, %s14
      %p228 = scmp.lt.s32.totalorder %s14, 9
      %p229 = pnand %p227, %p228
      %p230 = pneg %p229
      // Predicated region
      $region37: #{tpu_custom_call.1} parent=5 // pred_check
        _
      $region38: #{tpu_custom_call.1} parent=5 // pred_check_branch
        %232 = sbr.rel (%p229) target = $region40
      $region39: #{tpu_custom_call.1} parent=5 // pred_region
        %s233 = ssub.s32 %s14, 1
        %p234 = scmp.lt.s32.totalorder %s23, 1
        %s235 = scalar_select %p234, %s23, 1
        %s236 = smul.addr %s235, 4
        %s237 = scalar_lea.vmem %s0, %s236
        %p238 = pneg %p52
        %p239 = pneg %p49
        %p240 = scmp.lt.s32.totalorder %s24, 3
        %s241 = scalar_select %p240, %s24, 3
        %s242 = smul.addr %s241, 4
        %s243 = smul.addr %s242, 4
        %s244 = scalar_lea.vmem %s1, %s243
        %p245 = pneg %p78
        %p246 = pneg %p75
        %p247 = scmp.lt.s32.totalorder %s24, 3
        %s248 = scalar_select %p247, %s24, 3
        %s249 = scalar_lea.vmem %s2, %s248
        %p250 = pneg %p104
        %p251 = pneg %p101
        %p252 = scmp.lt.s32.totalorder %s24, 3
        %s253 = scalar_select %p252, %s24, 3
        %s254 = smul.addr %s253, 4
        %s255 = scalar_lea.vmem %s3, %s254
        %p256 = pneg %p130
        %p257 = pneg %p127
        %p258 = pneg %p151
        %p259 = pneg %p148
        %p260 = pneg %p177
        %p261 = pneg %p174
        %s262 = sand.u32 %s164, 1
        %s263 = scalar_lea.sflag [#allocation4], %s262
        %s264 = sand.u32 %s164, 1
        %s265 = smul.addr %s264, 8
        %s266 = scalar_lea.vmem [#allocation3], %s265
        %p267 = scmp.lt.s32.totalorder %s23, 1
        %s268 = scalar_select %p267, %s23, 1
        %s269 = smul.addr %s268, 4
        %s270 = scalar_lea.vmem %s0, %s269
        %p271 = scmp.lt.s32.totalorder %s24, 3
        %s272 = scalar_select %p271, %s24, 3
        %s273 = smul.addr %s272, 4
        %s274 = smul.addr %s273, 4
        %s275 = scalar_lea.vmem %s1, %s274
        %p276 = scmp.lt.s32.totalorder %s24, 3
        %s277 = scalar_select %p276, %s24, 3
        %s278 = scalar_lea.vmem %s2, %s277
        %p279 = scmp.lt.s32.totalorder %s24, 3
        %s280 = scalar_select %p279, %s24, 3
        %s281 = smul.addr %s280, 4
        %s282 = scalar_lea.vmem %s3, %s281
        %p284 = scmp.eq.s32.totalorder %s24, 0
        // Predicated region
        $region41: #{tpu_custom_call.1} parent=39 // pred_check
          %p285 = pneg %p284
        $region42: #{tpu_custom_call.1} parent=39 // pred_check_branch
          %287 = sbr.rel (%p285) target = $region44
        $region43: #{tpu_custom_call.1} parent=39 // pred_region
          %vm288 = vcmask 261120
          %289 = vst.msk [vmem:[#allocation2] sm:$0xff] %vm288, 0.0
        $region44: #{tpu_custom_call.1} parent=39 // pred_fallthru
          _
        %v290 = vld [vmem:[%s270] sm:$0xf]
        %v291 = vld [vmem:[%s275] sm:$0xf]
        %v292 = vld [vmem:[%s275 + $0x4] sm:$0xf]
        %v293 = vld [vmem:[%s275 + $0x8] sm:$0xf]
        %v294 = vld [vmem:[%s275 + $0xc] sm:$0xf]
        %v295 = vld [vmem:[%s278] sm:$0x1]
        %v297 = vlaneseq
        %v298 = vshrl.u32 %v297, 7
        %v299 = vsub.s32 0, %v298
        %v300 = vrot.slane %v295, %v299
        %v306 = vunpack.c.l.b16 %v291
        %v307 = vunpack.c.l.b16 %v292
        %v308 = vunpack.c.l.b16 %v293
        %v309 = vunpack.c.l.b16 %v294
        %v310 = vpack.c.b16 %v307, %v306
        %v311 = vpack.c.b16 %v309, %v308
        %vm314 = vcmask 261120
        %v316 = vsel %vm314, %v290, 0
        %318 = vmatprep.subr.bf16.mxu0 0
        %319 = vmatpush1.bf16.msra.mxu0 %v310
        %320 = vmatprep.subr.bf16.mxu0 0
        %321 = vmatpush1.bf16.msra.mxu0 %v311
        %322 = vmatprep.subr.bf16.mxu0 0
        %323 = vmatpush1.bf16.msra.mxu0 0
        %324 = vmatprep.subr.bf16.mxu0 0
        %325 = vmatpush1.bf16.msra.mxu0 0
        %326 = vmatprep.subr.bf16.mxu0 0
        %327 = vmatpush1.bf16.msra.mxu0 0
        %328 = vmatprep.subr.bf16.mxu0 0
        %329 = vmatpush1.bf16.msra.mxu0 0
        %330 = vmatprep.subr.bf16.mxu0 0
        %331 = vmatpush1.bf16.msra.mxu0 0
        %332 = vmatprep.subr.bf16.mxu0 0
        %333 = vmatpush1.bf16.msra.mxu0 0
        %334 = vmatprep.subr.bf16.mxu0 0
        %335 = vmatpush1.bf16.msra.mxu0 0
        %336 = vmatprep.subr.bf16.mxu0 0
        %337 = vmatpush1.bf16.msra.mxu0 0
        %338 = vmatprep.subr.bf16.mxu0 0
        %339 = vmatpush1.bf16.msra.mxu0 0
        %340 = vmatprep.subr.bf16.mxu0 0
        %341 = vmatpush1.bf16.msra.mxu0 0
        %342 = vmatprep.subr.bf16.mxu0 0
        %343 = vmatpush1.bf16.msra.mxu0 0
        %344 = vmatprep.subr.bf16.mxu0 0
        %345 = vmatpush1.bf16.msra.mxu0 0
        %346 = vmatprep.subr.bf16.mxu0 0
        %347 = vmatpush1.bf16.msra.mxu0 0
        %348 = vmatprep.subr.bf16.mxu0 0
        %349 = vmatpush1.bf16.msra.mxu0 0
        %350 = vmatprep.mubr.bf16.mxu0 0
        %351 = vmatmul.mubr.bf16.gmra.mrb[0].mxu0 %v316
        %v352 = vpop.f32.mrb[0].mxu0
        %v353 = vadd.f32 %v300, %v352
        %v354 = vpop.f32.mrb[0].mxu0
        %v355 = vpop.f32.mrb[0].mxu0
        %v356 = vpop.f32.mrb[0].mxu0
        %357 = vdwg.mxu0
        %v358 = vpack.c.bf16 %v353, %v353
        %360 = vrot.lane.b32.xlu0 %v358, 120
        %v361 = vpop.permute.xlu0 %360
        %vm362 = vcmask 64512
        %v364 = vsel %vm362, %v358, 0
        %v367 = vsel %vm362, %v361, 0
        %369 = vmatprep.subr.bf16.mxu0 0
        %370 = vmatpush1.bf16.xpose.msra.mxu0 %v367
        %371 = vmatprep.subr.bf16.mxu0 0
        %372 = vmatpush1.bf16.xpose.msra.mxu0 0
        %373 = vmatprep.subr.bf16.mxu0 0
        %374 = vmatpush1.bf16.xpose.msra.mxu0 0
        %375 = vmatprep.subr.bf16.mxu0 0
        %376 = vmatpush1.bf16.xpose.msra.mxu0 0
        %377 = vmatprep.subr.bf16.mxu0 0
        %378 = vmatpush1.bf16.xpose.msra.mxu0 0
        %379 = vmatprep.subr.bf16.mxu0 0
        %380 = vmatpush1.bf16.xpose.msra.mxu0 0
        %381 = vmatprep.subr.bf16.mxu0 0
        %382 = vmatpush1.bf16.xpose.msra.mxu0 0
        %383 = vmatprep.subr.bf16.mxu0 0
        %384 = vmatpush1.bf16.xpose.msra.mxu0 0
        %385 = vmatprep.subr.bf16.mxu0 0
        %386 = vmatpush1.bf16.xpose.msra.mxu0 0
        %387 = vmatprep.subr.bf16.mxu0 0
        %388 = vmatpush1.bf16.xpose.msra.mxu0 0
        %389 = vmatprep.subr.bf16.mxu0 0
        %390 = vmatpush1.bf16.xpose.msra.mxu0 0
        %391 = vmatprep.subr.bf16.mxu0 0
        %392 = vmatpush1.bf16.xpose.msra.mxu0 0
        %393 = vmatprep.subr.bf16.mxu0 0
        %394 = vmatpush1.bf16.xpose.msra.mxu0 0
        %395 = vmatprep.subr.bf16.mxu0 0
        %396 = vmatpush1.bf16.xpose.msra.mxu0 0
        %397 = vmatprep.subr.bf16.mxu0 0
        %398 = vmatpush1.bf16.xpose.msra.mxu0 0
        %399 = vmatprep.subr.bf16.mxu0 0
        %400 = vmatpush1.bf16.xpose.msra.mxu0 0
        %401 = vmatprep.mubr.bf16.mxu0 0
        %402 = vmatmul.mubr.bf16.gmra.mrb[0].mxu0 %v364
        %v403 = vpop.f32.mrb[0].mxu0
        %v404 = vadd.f32 0.0, %v403
        %v405 = vpop.f32.mrb[0].mxu0
        %v406 = vpop.f32.mrb[0].mxu0
        %v407 = vpop.f32.mrb[0].mxu0
        %408 = vdwg.mxu0
        %v409 = vmul.f32 %v404, 0.35355338
        %v410 = vlaneseq
        %v411 = vshrl.u32 %v410, 7
        %v412 = vlaneseq
        %v413 = vand.u32 %v412, 127
        %vm414 = vcmp.ge.s32.totalorder %v411, %v413
        %v415 = vsel %vm414, %v409, -3.4028235e+38
        %v416 = vsel %vm362, %v415, -inf
        %417 = vmax.xlane.f32.xlu0 %v416
        %v418 = vpop.xlane.xlu0 %417
        %v419 = vsub.f32 %v415, %v418
        %v420 = vmul.f32 %v419, 1.442695
        %v421 = vpow.pop %v420
        %v422 = vsel %vm362, %v421, 0.0
        %423 = vadd.xlane.f32.xlu0 %v422
        %v424 = vpop.xlane.xlu0 %423
        %v425 = vrcp.pop %v424
        %v426 = vmul.f32 %v421, %v425
        %v427 = vpack.c.bf16 %v426, %v426
        %428 = vrot.lane.b32.xlu0 %v358, 112
        %v429 = vpop.permute.xlu0 %428
        %v431 = vsel %vm362, %v427, 0
        %vm433 = vcmask 1043456
        %v435 = vsel %vm433, %v429, 0
        %437 = vmatprep.subr.bf16.mxu0 0
        %438 = vmatpush1.bf16.msra.mxu0 %v435
        %439 = vmatprep.subr.bf16.mxu0 0
        %440 = vmatpush1.bf16.msra.mxu0 0
        %441 = vmatprep.subr.bf16.mxu0 0
        %442 = vmatpush1.bf16.msra.mxu0 0
        %443 = vmatprep.subr.bf16.mxu0 0
        %444 = vmatpush1.bf16.msra.mxu0 0
        %445 = vmatprep.subr.bf16.mxu0 0
        %446 = vmatpush1.bf16.msra.mxu0 0
        %447 = vmatprep.subr.bf16.mxu0 0
        %448 = vmatpush1.bf16.msra.mxu0 0
        %449 = vmatprep.subr.bf16.mxu0 0
        %450 = vmatpush1.bf16.msra.mxu0 0
        %451 = vmatprep.subr.bf16.mxu0 0
        %452 = vmatpush1.bf16.msra.mxu0 0
        %453 = vmatprep.subr.bf16.mxu0 0
        %454 = vmatpush1.bf16.msra.mxu0 0
        %455 = vmatprep.subr.bf16.mxu0 0
        %456 = vmatpush1.bf16.msra.mxu0 0
        %457 = vmatprep.subr.bf16.mxu0 0
        %458 = vmatpush1.bf16.msra.mxu0 0
        %459 = vmatprep.subr.bf16.mxu0 0
        %460 = vmatpush1.bf16.msra.mxu0 0
        %461 = vmatprep.subr.bf16.mxu0 0
        %462 = vmatpush1.bf16.msra.mxu0 0
        %463 = vmatprep.subr.bf16.mxu0 0
        %464 = vmatpush1.bf16.msra.mxu0 0
        %465 = vmatprep.subr.bf16.mxu0 0
        %466 = vmatpush1.bf16.msra.mxu0 0
        %467 = vmatprep.subr.bf16.mxu0 0
        %468 = vmatpush1.bf16.msra.mxu0 0
        %469 = vmatprep.mubr.bf16.mxu0 0
        %470 = vmatmul.mubr.bf16.gmra.mrb[0].mxu0 %v431
        %v471 = vpop.f32.mrb[0].mxu0
        %v472 = vadd.f32 0.0, %v471
        %v473 = vpop.f32.mrb[0].mxu0
        %v474 = vpop.f32.mrb[0].mxu0
        %v475 = vpop.f32.mrb[0].mxu0
        %476 = vdwg.mxu0
        %v477 = vld [vmem:[#allocation2] sm:$0xff]
        %v478 = vpack.c.bf16 %v472, %v472
        %v479 = vld [vmem:[%s282] sm:$0xf]
        %v481 = vsel %vm362, %v478, 0
        %v484 = vsel %vm433, %v479, 0
        %486 = vmatprep.subr.bf16.mxu0 0
        %487 = vmatpush1.bf16.msra.mxu0 %v484
        %488 = vmatprep.subr.bf16.mxu0 0
        %489 = vmatpush1.bf16.msra.mxu0 0
        %490 = vmatprep.subr.bf16.mxu0 0
        %491 = vmatpush1.bf16.msra.mxu0 0
        %492 = vmatprep.subr.bf16.mxu0 0
        %493 = vmatpush1.bf16.msra.mxu0 0
        %494 = vmatprep.subr.bf16.mxu0 0
        %495 = vmatpush1.bf16.msra.mxu0 0
        %496 = vmatprep.subr.bf16.mxu0 0
        %497 = vmatpush1.bf16.msra.mxu0 0
        %498 = vmatprep.subr.bf16.mxu0 0
        %499 = vmatpush1.bf16.msra.mxu0 0
        %500 = vmatprep.subr.bf16.mxu0 0
        %501 = vmatpush1.bf16.msra.mxu0 0
        %502 = vmatprep.subr.bf16.mxu0 0
        %503 = vmatpush1.bf16.msra.mxu0 0
        %504 = vmatprep.subr.bf16.mxu0 0
        %505 = vmatpush1.bf16.msra.mxu0 0
        %506 = vmatprep.subr.bf16.mxu0 0
        %507 = vmatpush1.bf16.msra.mxu0 0
        %508 = vmatprep.subr.bf16.mxu0 0
        %509 = vmatpush1.bf16.msra.mxu0 0
        %510 = vmatprep.subr.bf16.mxu0 0
        %511 = vmatpush1.bf16.msra.mxu0 0
        %512 = vmatprep.subr.bf16.mxu0 0
        %513 = vmatpush1.bf16.msra.mxu0 0
        %514 = vmatprep.subr.bf16.mxu0 0
        %515 = vmatpush1.bf16.msra.mxu0 0
        %516 = vmatprep.subr.bf16.mxu0 0
        %517 = vmatpush1.bf16.msra.mxu0 0
        %518 = vmatprep.mubr.bf16.mxu0 0
        %519 = vmatmul.mubr.bf16.gmra.mrb[0].mxu0 %v481
        %v520 = vpop.f32.mrb[0].mxu0
        %v521 = vadd.f32 0.0, %v520
        %v522 = vpop.f32.mrb[0].mxu0
        %v523 = vpop.f32.mrb[0].mxu0
        %v524 = vpop.f32.mrb[0].mxu0
        %525 = vdwg.mxu0
        %v526 = vadd.f32 %v477, %v521
        %527 = vst.msk [vmem:[#allocation2] sm:$0xff] %vm314, %v526
        %p528 = scmp.eq.s32.totalorder %s24, 3
        // Predicated region
        $region45: #{tpu_custom_call.1} parent=39 // pred_check
          %p529 = pneg %p528
        $region46: #{tpu_custom_call.1} parent=39 // pred_check_branch
          %531 = sbr.rel (%p529) target = $region48
        $region47: #{tpu_custom_call.1} parent=39 // pred_region
          %v532 = vld [vmem:[#allocation2] sm:$0xff]
          %v533 = vld [vmem:[%s4] sm:$0x1]
          %v535 = vlaneseq
          %v536 = vshrl.u32 %v535, 7
          %v537 = vsub.s32 0, %v536
          %v538 = vrot.slane %v533, %v537
          %v540 = vadd.f32 %v532, %v538
          %541 = vst.msk [vmem:[%s266] sm:$0xff] %vm314, %v540
        $region48: #{tpu_custom_call.1} parent=39 // pred_fallthru
          _
        %s542 = sand.u32 %s164, 1
        %s543 = scalar_lea.sflag [#allocation4], %s542
        %s544 = sand.u32 %s164, 1
        %s545 = smul.addr %s544, 8
        %s546 = scalar_lea.vmem [#allocation3], %s545
        // Predicated region
        $region49: #{tpu_custom_call.1} parent=39 // pred_check
          %p547 = pneg %p174
        $region50: #{tpu_custom_call.1} parent=39 // pred_check_branch
          %549 = sbr.rel (%p547) target = $region52
        $region51: #{tpu_custom_call.1} parent=39 // pred_region
          %s551 = ssub.s32 128, 128
          %552 = vsyncadd %s543, %s551
          %s553 = smul.addr %s23, 128
          %s554 = scalar_lea.hbm %s5, %s553
          %s556 = sshll.u32 %s546, 4
          %s557 = int_to_ptr.vmem [resolvable:$true] %s556
          %559 = dma.vmem_to_hbm [thread:$0]  %s557, 128, %s554, %s543
        $region52: #{tpu_custom_call.1} parent=39 // pred_fallthru
          _
      $region40: #{tpu_custom_call.1} parent=5 // pred_fallthru
        _
      %p560 = scmp.le.s32.totalorder 2, %s14
      // Predicated region
      $region53: #{tpu_custom_call.1} parent=5 // pred_check
        %p561 = pneg %p560
      $region54: #{tpu_custom_call.1} parent=5 // pred_check_branch
        %563 = sbr.rel (%p561) target = $region56
      $region55: #{tpu_custom_call.1} parent=5 // pred_region
        %s564 = ssub.s32 %s14, 2
        // Predicated region
        $region57: #{tpu_custom_call.1} parent=55 // pred_check
          %p565 = pneg %p180
        $region58: #{tpu_custom_call.1} parent=55 // pred_check_branch
          %567 = sbr.rel (%p565) target = $region60
        $region59: #{tpu_custom_call.1} parent=55 // pred_region
          %s568 = sand.u32 %s165, 1
          %s569 = scalar_lea.sflag [#allocation4], %s568
          %s570 = sand.u32 %s165, 1
          %s571 = smul.addr %s570, 8
          %s572 = scalar_lea.vmem [#allocation3], %s571
          %573 = dma.done %s569, 128
        $region60: #{tpu_custom_call.1} parent=55 // pred_fallthru
          _
      $region56: #{tpu_custom_call.1} parent=5 // pred_fallthru
        _
    $region6: #{tpu_custom_call.1} parent=1 // loop_footer
      %s18 = sadd.s32 1, %s14
    $region7: #{tpu_custom_call.1} parent=1 // loop_footer_branch
      %13 = sbr.rel target = $region3
    $region8: #{tpu_custom_call.1} parent=1 // loop_exit
      _
    %574 = vsyncpa [#allocation4], 1
    %s575 = scalar_lea.sflag [#allocation4], 1
    %576 = vsyncpa %s575, 1

</llo_original>
